<compile_context>
chip_gen: v7x
topology: tpu7x:2x2x1
jax: 0.10.0
libtpu: 0.0.40
codegen_flags: <defaults>
</compile_context>

<pallas_src>
import functools
from itertools import permutations

import numpy as np
import jax
import jax.numpy as jnp
from jax.experimental import pallas as pl
from jax.experimental.pallas import tpu as pltpu

# ----- structural constants baked into the PyTorch module -----
N_AGENTS = 20        # physical agents
N_PAIRS = 190        # C(20, 2) unique unordered agent pairs
N_NEIGH = 19         # pairs touching each agent
N_SLOTS = 24         # N_NEIGH padded up to a multiple of 8 (duplicate pairs)
PHYS_FEAT = 13       # per-agent world-coordinate features (pair concat -> 26)


def build_perm_structures():
    """Reproduce self.perm_array / self.perm_ind_ls from the module __init__."""
    perm_list = list(permutations(range(N_AGENTS), 2))
    perm_sorted = [np.sort(p) for p in perm_list]
    perm_array = np.unique(np.array(perm_sorted), axis=0)          # (190, 2)
    perm_ind_ls = []
    for k in range(N_AGENTS):
        cur = np.hstack((np.where(perm_array[:, 0] == k)[0],
                         np.where(perm_array[:, 1] == k)[0]))       # length 19
        perm_ind_ls.append(cur)
    return perm_array.astype(np.int32), np.stack(perm_ind_ls).astype(np.int32)


def build_gather_indices(perm_array, perm_ind):
    """Per-(agent, neighbor-slot) agent indices of both pair members, padded.

    Returns idx0, idx1 of shape (20, 24); slots 19..23 duplicate slot 0's pair
    (max-pool result is unchanged by duplicates).
    """
    pad = np.concatenate(
        [perm_ind, np.repeat(perm_ind[:, :1], N_SLOTS - N_NEIGH, axis=1)], axis=1
    )                                                   # (20, 24) pair indices
    idx0 = perm_array[pad, 0].astype(np.int32)          # (20, 24)
    idx1 = perm_array[pad, 1].astype(np.int32)          # (20, 24)
    return idx0, idx1


# ---------------------------------------------------------------------------
# Pallas kernel 1: fused glob+local embedding  (single matmul + bias)
# ---------------------------------------------------------------------------
def _embed_kernel(x_ref, w_ref, b_ref, o_ref):
    acc = jnp.dot(x_ref[...], w_ref[...], preferred_element_type=jnp.float32)
    o_ref[...] = (acc + b_ref[...]).astype(o_ref.dtype)


def fused_embed(x2d, w, b):
    M, K = x2d.shape
    N = w.shape[1]
    # 2 parallel blocks when row count allows 8-aligned halves (v7x megacore),
    # otherwise a single full-array block (always legal).
    nb = 2 if M % 16 == 0 else 1
    tm = M // nb
    return pl.pallas_call(
        _embed_kernel,
        out_shape=jax.ShapeDtypeStruct((M, N), jnp.float32),
        grid=(nb,),
        in_specs=[
            pl.BlockSpec((tm, K), lambda i: (i, 0)),
            pl.BlockSpec((K, N), lambda i: (0, 0)),
            pl.BlockSpec((1, N), lambda i: (0, 0)),
        ],
        out_specs=pl.BlockSpec((tm, N), lambda i: (i, 0)),
        compiler_params=pltpu.CompilerParams(dimension_semantics=("parallel",)),
    )(x2d, w, b.reshape(1, N))


# ---------------------------------------------------------------------------
# Pallas kernel 2: fused phys MLP + per-agent MaxPool1d(19)
#   input rows are ordered (frame, agent, neighbor-slot); h1/h2 stay on-chip.
# ---------------------------------------------------------------------------
def _phys_pool_kernel(pf_ref, wp_ref, bp_ref, wp3_ref, bp3_ref, o_ref, *, n_slots):
    x = pf_ref[...]                                              # (rows, 26)
    h1 = jnp.dot(x, wp_ref[...], preferred_element_type=jnp.float32) + bp_ref[...]
    h1 = jnp.maximum(h1, 0.0)                                    # ReLU
    h2 = jnp.dot(h1, wp3_ref[...], preferred_element_type=jnp.float32) + bp3_ref[...]
    rows_out, hidden = o_ref.shape                               # (frames*20, H)
    h2 = h2.reshape(rows_out, n_slots, hidden)                   # 24 % 8 == 0 -> pure view
    o_ref[...] = jnp.max(h2, axis=1).astype(o_ref.dtype)         # sublane max


def fused_phys_pool(pf2d, wp, bp, wp3, bp3, *, n_frames):
    rows_per_frame = N_AGENTS * N_SLOTS                          # 480
    K = pf2d.shape[1]                                            # 26
    H = wp3.shape[1]
    # 2 parallel blocks when the output halves stay 8-sublane aligned.
    nb = 2 if n_frames % 4 == 0 else 1
    tf = n_frames // nb                                          # frames / block
    kernel = functools.partial(_phys_pool_kernel, n_slots=N_SLOTS)
    return pl.pallas_call(
        kernel,
        out_shape=jax.ShapeDtypeStruct((n_frames * N_AGENTS, H), jnp.float32),
        grid=(nb,),
        in_specs=[
            pl.BlockSpec((tf * rows_per_frame, K), lambda i: (i, 0)),
            pl.BlockSpec((wp.shape[0], wp.shape[1]), lambda i: (0, 0)),
            pl.BlockSpec((1, wp.shape[1]), lambda i: (0, 0)),
            pl.BlockSpec((wp3.shape[0], wp3.shape[1]), lambda i: (0, 0)),
            pl.BlockSpec((1, wp3.shape[1]), lambda i: (0, 0)),
        ],
        out_specs=pl.BlockSpec((tf * N_AGENTS, H), lambda i: (i, 0)),
        compiler_params=pltpu.CompilerParams(dimension_semantics=("parallel",)),
    )(pf2d, wp, bp.reshape(1, -1), wp3, bp3.reshape(1, -1))


# ---------------------------------------------------------------------------
# EmbedLayer forward
# ---------------------------------------------------------------------------
def embed_layer_forward(x, world_coord_feat, params, gather_idx0, gather_idx1):
    B, T, A, n_in = x.shape
    n_img = params["Wg"].shape[1]
    n_att = params["Wl"].shape[1]

    # glob/local embeddings: one fused linear over all tokens, slice afterwards
    w_comb = jnp.concatenate([params["Wg"], params["Wl"]], axis=1)   # (n_in, n_img+n_att)
    b_comb = jnp.concatenate([params["bg"], params["bl"]], axis=0)
    emb = fused_embed(x.reshape(B * T * A, n_in), w_comb, b_comb)
    emb = emb.reshape(B, T, A, n_img + n_att)
    glob_embed = emb[:, :, 0, :n_img]                                # (B,T,n_img)
    loc_embed = emb[:, :, 1:, n_img:]                                # (B,T,A-1,n_att)

    # pair features gathered per (agent, neighbor-slot), padded to 24 slots
    i0 = jnp.asarray(gather_idx0).reshape(-1)                        # (480,)
    i1 = jnp.asarray(gather_idx1).reshape(-1)
    g0 = jnp.take(world_coord_feat, i0, axis=2)                      # (B,T,480,13)
    g1 = jnp.take(world_coord_feat, i1, axis=2)                      # (B,T,480,13)
    pf2d = jnp.concatenate([g0, g1], axis=-1).reshape(
        B * T * N_AGENTS * N_SLOTS, 2 * PHYS_FEAT)                   # (B*T*480, 26)

    # fused phys MLP (dropout = identity in eval mode) + per-agent max pool
    agent = fused_phys_pool(pf2d, params["Wp"], params["bp"],
                            params["Wp3"], params["bp3"], n_frames=B * T)
    agent_tensor = agent.reshape(B, T, N_AGENTS, -1)

    return glob_embed, loc_embed, agent_tensor


# ---------------------------------------------------------------------------
# pure-JAX reference (semantics of the PyTorch forward, eval mode)
# ---------------------------------------------------------------------------
def reference_forward(x, wc, params, perm_array, perm_ind):
    hp = jax.lax.Precision.HIGHEST
    glob = jnp.dot(x[:, :, 0, :], params["Wg"], precision=hp) + params["bg"]
    loc = jnp.dot(x[:, :, 1:, :], params["Wl"], precision=hp) + params["bl"]
    pa = jnp.asarray(perm_array)
    perm = jnp.concatenate(
        [jnp.take(wc, pa[:, 0], axis=2), jnp.take(wc, pa[:, 1], axis=2)], axis=-1
    )
    h1 = jax.nn.relu(jnp.dot(perm, params["Wp"], precision=hp) + params["bp"])
    h2 = jnp.dot(h1, params["Wp3"], precision=hp) + params["bp3"]
    gathered = jnp.take(h2, jnp.asarray(perm_ind), axis=2)      # (B,T,20,19,Hp)
    agent = gathered.max(axis=3)
    return glob, loc, agent


if __name__ == "__main__":
    # small shapes consistent with the module structure
    B, T = 2, 8
    A = 1 + N_AGENTS          # 1 global slot + 20 agents
    n_input = 32
    n_img_hidden = 32
    n_att_hidden = 16
    n_hidden_phys = 32

    perm_array, perm_ind = build_perm_structures()
    gather_idx0, gather_idx1 = build_gather_indices(perm_array, perm_ind)

    # deterministic synthetic parameters (weights stored as (in, out))
    key = jax.random.PRNGKey(0)
    ks = jax.random.split(key, 10)
    params = {
        "Wg": jax.random.normal(ks[0], (n_input, n_img_hidden), jnp.float32) * 0.05,
        "bg": jax.random.normal(ks[1], (n_img_hidden,), jnp.float32) * 0.05,
        "Wl": jax.random.normal(ks[2], (n_input, n_att_hidden), jnp.float32) * 0.05,
        "bl": jax.random.normal(ks[3], (n_att_hidden,), jnp.float32) * 0.05,
        "Wp": jax.random.normal(ks[4], (2 * PHYS_FEAT, n_hidden_phys), jnp.float32) * 0.1,
        "bp": jax.random.normal(ks[5], (n_hidden_phys,), jnp.float32) * 0.1,
        "Wp3": jax.random.normal(ks[6], (n_hidden_phys, n_hidden_phys), jnp.float32) * 0.1,
        "bp3": jax.random.normal(ks[7], (n_hidden_phys,), jnp.float32) * 0.1,
    }

    # deterministic example inputs
    x = jax.random.normal(ks[8], (B, T, A, n_input), jnp.float32)
    world_coord_feat = jax.random.normal(ks[9], (B, T, N_AGENTS, PHYS_FEAT), jnp.float32)

    glob, loc, agent = embed_layer_forward(
        x, world_coord_feat, params, gather_idx0, gather_idx1)
    jax.block_until_ready((glob, loc, agent))

    # correctness check against pure-JAX reference
    g_ref, l_ref, a_ref = reference_forward(x, world_coord_feat, params, perm_array, perm_ind)
    np.testing.assert_allclose(np.asarray(glob), np.asarray(g_ref), rtol=1e-3, atol=1e-3)
    np.testing.assert_allclose(np.asarray(loc), np.asarray(l_ref), rtol=1e-3, atol=1e-3)
    np.testing.assert_allclose(np.asarray(agent), np.asarray(a_ref), rtol=1e-3, atol=1e-3)

    assert glob.shape == (B, T, n_img_hidden)
    assert loc.shape == (B, T, N_AGENTS, n_att_hidden)
    assert agent.shape == (B, T, N_AGENTS, n_hidden_phys)

    print("KERNEL_OK")
</pallas_src>

<mosaic_0001>
module attributes {stable_mosaic.version = 11 : i64} {
  func.func @_embed_kernel(%arg0: i32, %arg1: memref<168x32xf32, #tpu.memory_space<vmem>>, %arg2: memref<32x48xf32, #tpu.memory_space<vmem>>, %arg3: memref<1x48xf32, #tpu.memory_space<vmem>>, %arg4: memref<168x48xf32, #tpu.memory_space<vmem>>) attributes {dimension_semantics = [#tpu.dimension_semantics<parallel>], iteration_bounds = array<i64: 2>, scalar_prefetch = 0 : i64, scratch_operands = 0 : i64, tpu.core_type = #tpu.core_type<tc>, window_params = [{transform_indices = @transform_0, window_bounds = array<i64: 168, 32>}, {pipeline_mode = #tpu.pipeline_mode<synchronous>, transform_indices = @transform_1, window_bounds = array<i64: 32, 48>}, {pipeline_mode = #tpu.pipeline_mode<synchronous>, transform_indices = @transform_2, window_bounds = array<i64: 1, 48>}, {transform_indices = @transform_3, window_bounds = array<i64: 168, 48>}]} {
    %c0 = arith.constant 0 : index
    %c0_0 = arith.constant 0 : index
    %0 = vector.load %arg1[%c0, %c0_0] : memref<168x32xf32, #tpu.memory_space<vmem>>, vector<168x32xf32>
    %c0_1 = arith.constant 0 : index
    %c0_2 = arith.constant 0 : index
    %1 = vector.load %arg2[%c0_1, %c0_2] : memref<32x48xf32, #tpu.memory_space<vmem>>, vector<32x48xf32>
    %cst = arith.constant dense<0.000000e+00> : vector<168x48xf32>
    %2 = tpu.matmul %0, %1, %cst {dimension_numbers = #tpu.dot_dimension_numbers<[1], [0], [0], [1], [0, 0, 1, 1], [], []>} : vector<168x32xf32>, vector<32x48xf32>, vector<168x48xf32> -> vector<168x48xf32>
    %c0_3 = arith.constant 0 : index
    %c0_4 = arith.constant 0 : index
    %3 = vector.load %arg3[%c0_3, %c0_4] : memref<1x48xf32, #tpu.memory_space<vmem>>, vector<1x48xf32>
    %4 = vector.broadcast %3 : vector<1x48xf32> to vector<168x48xf32>
    %5 = arith.addf %2, %4 : vector<168x48xf32>
    %c0_5 = arith.constant 0 : index
    %c0_6 = arith.constant 0 : index
    %6 = vector.load %arg4[%c0_5, %c0_6] : memref<168x48xf32, #tpu.memory_space<vmem>>, vector<168x48xf32>
    tpu.vector_store %arg4[%c0_5, %c0_6], %5 {strides = array<i32>} : memref<168x48xf32, #tpu.memory_space<vmem>>, vector<168x48xf32>,
    return
  }
  func.func @transform_0(%arg0: i32) -> (i32, i32) {
    %c0_i32 = arith.constant 0 : i32
    %c0_i32_0 = arith.constant 0 : i32
    return %arg0, %c0_i32 : i32, i32
  }
  func.func @transform_1(%arg0: i32) -> (i32, i32) {
    %c0_i32 = arith.constant 0 : i32
    %c0_i32_0 = arith.constant 0 : i32
    %c0_i32_1 = arith.constant 0 : i32
    return %c0_i32, %c0_i32_0 : i32, i32
  }
  func.func @transform_2(%arg0: i32) -> (i32, i32) {
    %c0_i32 = arith.constant 0 : i32
    %c0_i32_0 = arith.constant 0 : i32
    %c0_i32_1 = arith.constant 0 : i32
    return %c0_i32, %c0_i32_0 : i32, i32
  }
  func.func @transform_3(%arg0: i32) -> (i32, i32) {
    %c0_i32 = arith.constant 0 : i32
    %c0_i32_0 = arith.constant 0 : i32
    return %arg0, %c0_i32 : i32, i32
  }
}

</mosaic_0001>

<llo_original>
// kernel: tpu_custom_call.1
$region0: #{tpu_custom_call.1}
  #allocation0 [shape = 'u32[]', space=smem, size = 0x4, offset = 0x4, fixed_abs, tag = 'smem constant byte address 0x4 - core index']
  #allocation1 [shape = 'u32[144,128]{1,0:T(1,128)}', space=vmem, size = 0x12000, scoped, tag = 'internal scratch']
  %s0 = inlined_call_operand.vmem [shape: f32[336,32], index: 0, kind: input, shape index: {}]
  %s1 = inlined_call_operand.vmem [shape: f32[32,48], index: 1, kind: input, shape index: {}]
  %s2 = inlined_call_operand.vmem [shape: f32[1,48], index: 2, kind: input, shape index: {}]
  %s3 = inlined_call_operand.vmem [shape: f32[336,48], index: 3, kind: output, shape index: {}]
  %s4 = sld [smem:[#allocation0]]
  $region45: #{tpu_custom_call.1} parent=0
    _
  %s6 = ssub.s32 1, %s4
  %s7 = scalar_select 0, %s6, %s4
  loop: start=0, step=1, limit=4
  $region2: #{tpu_custom_call.1} parent=0 // loop_pre_header
    _
  $region3: #{tpu_custom_call.1} parent=0 // loop_header
    %s9 = sphi 0, %s13
    %p10 = scmp.ge.s32.totalorder %s9, 4
    %s19 = sphi 0, %s21
    %s22 = sphi 0, %s19
    %s23 = sphi 0, %s22
    %s39 = sphi 0, %s23
    %s43 = sphi 0, %s43
    %s45 = sphi 0, %s43
    %s46 = sphi 0, %s45
    %s60 = sphi 0, %s46
    %s64 = sphi 0, %s64
    %s66 = sphi 0, %s64
    %s67 = sphi 0, %s66
    %s81 = sphi 0, %s67
    %s87 = sphi 0, %s89
    %s90 = sphi 0, %s87
    %s91 = sphi 0, %s90
    %s107 = sphi 0, %s91
  $region4: #{tpu_custom_call.1} parent=0 // loop_header_branch
    %12 = sbr.rel (%p10) target = $region8
  $region5: #{tpu_custom_call.1} parent=0 // loop_body
    %s14 = ssub.s32 %s9, 1
    %s15 = ssub.s32 %s9, 2
    %s16 = sadd.s32 %s9, 1
    %s17 = ssub.s32 %s9, %s16
    %p18 = scmp.eq.s32.totalorder %s17, 0
    %s20 = sadd.s32 %s19, 1
    %s21 = scalar_select %p18, %s19, %s20
    %p24 = pneg %p18
    %p25 = scmp.eq.s32.totalorder %s9, 1
    %p26 = por %p24, %p25
    %p27 = scmp.ne.s32.totalorder %s19, %s22
    %p28 = scmp.eq.s32.totalorder %s9, 0
    %p29 = por %p27, %p28
    %p30 = scmp.ne.s32.totalorder %s19, %s22
    %p31 = scmp.eq.s32.totalorder %s14, 1
    %p32 = por %p30, %p31
    %p33 = scmp.ne.s32.totalorder %s22, %s23
    %p34 = scmp.eq.s32.totalorder %s14, 0
    %p35 = por %p33, %p34
    %p36 = scmp.ne.s32.totalorder %s22, %s23
    %p37 = scmp.eq.s32.totalorder %s15, 1
    %p38 = por %p36, %p37
    %p40 = scmp.ne.s32.totalorder %s23, %s39
    %p41 = scmp.eq.s32.totalorder %s15, 0
    %p42 = por %p40, %p41
    %s44 = sadd.s32 %s43, 1
    %p47 = scmp.eq.s32.totalorder %s9, 1
    %p48 = scmp.ne.s32.totalorder %s43, %s45
    %p49 = scmp.eq.s32.totalorder %s9, 0
    %p50 = por %p48, %p49
    %p51 = scmp.ne.s32.totalorder %s43, %s45
    %p52 = scmp.eq.s32.totalorder %s14, 1
    %p53 = por %p51, %p52
    %p54 = scmp.ne.s32.totalorder %s45, %s46
    %p55 = scmp.eq.s32.totalorder %s14, 0
    %p56 = por %p54, %p55
    %p57 = scmp.ne.s32.totalorder %s45, %s46
    %p58 = scmp.eq.s32.totalorder %s15, 1
    %p59 = por %p57, %p58
    %p61 = scmp.ne.s32.totalorder %s46, %s60
    %p62 = scmp.eq.s32.totalorder %s15, 0
    %p63 = por %p61, %p62
    %s65 = sadd.s32 %s64, 1
    %p68 = scmp.eq.s32.totalorder %s9, 1
    %p69 = scmp.ne.s32.totalorder %s64, %s66
    %p70 = scmp.eq.s32.totalorder %s9, 0
    %p71 = por %p69, %p70
    %p72 = scmp.ne.s32.totalorder %s64, %s66
    %p73 = scmp.eq.s32.totalorder %s14, 1
    %p74 = por %p72, %p73
    %p75 = scmp.ne.s32.totalorder %s66, %s67
    %p76 = scmp.eq.s32.totalorder %s14, 0
    %p77 = por %p75, %p76
    %p78 = scmp.ne.s32.totalorder %s66, %s67
    %p79 = scmp.eq.s32.totalorder %s15, 1
    %p80 = por %p78, %p79
    %p82 = scmp.ne.s32.totalorder %s67, %s81
    %p83 = scmp.eq.s32.totalorder %s15, 0
    %p84 = por %p82, %p83
    %s85 = ssub.s32 %s9, %s16
    %p86 = scmp.eq.s32.totalorder %s85, 0
    %s88 = sadd.s32 %s87, 1
    %s89 = scalar_select %p86, %s87, %s88
    %p92 = pneg %p86
    %p93 = scmp.eq.s32.totalorder %s9, 1
    %p94 = por %p92, %p93
    %p95 = scmp.ne.s32.totalorder %s87, %s90
    %p96 = scmp.eq.s32.totalorder %s9, 0
    %p97 = por %p95, %p96
    %p98 = scmp.ne.s32.totalorder %s87, %s90
    %p99 = scmp.eq.s32.totalorder %s14, 1
    %p100 = por %p98, %p99
    %p101 = scmp.ne.s32.totalorder %s90, %s91
    %p102 = scmp.eq.s32.totalorder %s14, 0
    %p103 = por %p101, %p102
    %p104 = scmp.ne.s32.totalorder %s90, %s91
    %p105 = scmp.eq.s32.totalorder %s15, 1
    %p106 = por %p104, %p105
    %p108 = scmp.ne.s32.totalorder %s91, %s107
    %p109 = scmp.eq.s32.totalorder %s15, 0
    %p110 = por %p108, %p109
    %p111 = scmp.le.s32.totalorder 1, %s9
    %p112 = scmp.lt.s32.totalorder %s9, 3
    %p113 = pnand %p111, %p112
    %p114 = pneg %p113
    // Predicated region
    $region9: #{tpu_custom_call.1} parent=5 // pred_check
      _
    $region10: #{tpu_custom_call.1} parent=5 // pred_check_branch
      %116 = sbr.rel (%p113) target = $region12
    $region11: #{tpu_custom_call.1} parent=5 // pred_region
      %s117 = ssub.s32 %s9, 1
      // Predicated region
      $region13: #{tpu_custom_call.1} parent=11 // pred_check
        %p118 = pneg %p56
      $region14: #{tpu_custom_call.1} parent=11 // pred_check_branch
        %120 = sbr.rel (%p118) target = $region16
      $region15: #{tpu_custom_call.1} parent=11 // pred_region
        _
      $region16: #{tpu_custom_call.1} parent=11 // pred_fallthru
        _
      // Predicated region
      $region17: #{tpu_custom_call.1} parent=11 // pred_check
        %p121 = pneg %p77
      $region18: #{tpu_custom_call.1} parent=11 // pred_check_branch
        %123 = sbr.rel (%p121) target = $region20
      $region19: #{tpu_custom_call.1} parent=11 // pred_region
        _
      $region20: #{tpu_custom_call.1} parent=11 // pred_fallthru
        _
    $region12: #{tpu_custom_call.1} parent=5 // pred_fallthru
      _
    %p124 = scmp.lt.s32.totalorder %s9, 2
    // Predicated region
    $region21: #{tpu_custom_call.1} parent=5 // pred_check
      %p125 = pneg %p124
    $region22: #{tpu_custom_call.1} parent=5 // pred_check_branch
      %127 = sbr.rel (%p125) target = $region24
    $region23: #{tpu_custom_call.1} parent=5 // pred_region
      // Predicated region
      $region25: #{tpu_custom_call.1} parent=23 // pred_check
        %p128 = pneg %p29
      $region26: #{tpu_custom_call.1} parent=23 // pred_check_branch
        %130 = sbr.rel (%p128) target = $region28
      $region27: #{tpu_custom_call.1} parent=23 // pred_region
        %s131 = smul.u32 21, %s9
        %p132 = scmp.lt.s32.totalorder %s131, 41
        %s133 = scalar_select %p132, %s131, 41
        %s134 = smul.addr %s133, 8
        %s135 = scalar_lea.vmem %s0, %s134
        %s136 = smul.u32 21, %s9
      $region28: #{tpu_custom_call.1} parent=23 // pred_fallthru
        _
    $region24: #{tpu_custom_call.1} parent=5 // pred_fallthru
      _
    %p137 = scmp.le.s32.totalorder 1, %s9
    %p138 = scmp.lt.s32.totalorder %s9, 3
    %p139 = pnand %p137, %p138
    %p140 = pneg %p139
    // Predicated region
    $region29: #{tpu_custom_call.1} parent=5 // pred_check
      _
    $region30: #{tpu_custom_call.1} parent=5 // pred_check_branch
      %142 = sbr.rel (%p139) target = $region32
    $region31: #{tpu_custom_call.1} parent=5 // pred_region
      %s143 = ssub.s32 %s9, 1
      %s144 = smul.u32 21, %s14
      %p145 = scmp.lt.s32.totalorder %s144, 41
      %s146 = scalar_select %p145, %s144, 41
      %s147 = smul.addr %s146, 8
      %s148 = scalar_lea.vmem %s0, %s147
      %p149 = pneg %p35
      %p150 = pneg %p32
      %p151 = pneg %p56
      %p152 = pneg %p53
      %p153 = pneg %p77
      %p154 = pneg %p74
      %p155 = pneg %p103
      %p156 = pneg %p100
      %s157 = smul.u32 21, %s14
      %p158 = scmp.lt.s32.totalorder %s157, 41
      %s159 = scalar_select %p158, %s157, 41
      %s160 = smul.addr %s159, 8
      %s161 = scalar_lea.vmem %s3, %s160
      %s162 = smul.u32 21, %s14
      %p163 = scmp.lt.s32.totalorder %s162, 41
      %s164 = scalar_select %p163, %s162, 41
      %s165 = smul.addr %s164, 8
      %s166 = scalar_lea.vmem %s0, %s165
      %s167 = smul.u32 21, %s14
      %s168 = smul.u32 21, %s14
      %p169 = scmp.lt.s32.totalorder %s168, 41
      %s170 = scalar_select %p169, %s168, 41
      %s171 = smul.addr %s170, 8
      %s172 = scalar_lea.vmem %s3, %s171
      %s173 = smul.u32 21, %s14
      %v174 = vld [vmem:[%s166] sm:$0xff]
      %v175 = vld [vmem:[%s166 + $0x8] sm:$0xff]
      %v176 = vld [vmem:[%s166 + $0x10] sm:$0xff]
      %v177 = vld [vmem:[%s166 + $0x18] sm:$0xff]
      %v178 = vld [vmem:[%s166 + $0x20] sm:$0xff]
      %v179 = vld [vmem:[%s166 + $0x28] sm:$0xff]
      %v180 = vld [vmem:[%s166 + $0x30] sm:$0xff]
      %v181 = vld [vmem:[%s166 + $0x38] sm:$0xff]
      %v182 = vld [vmem:[%s166 + $0x40] sm:$0xff]
      %v183 = vld [vmem:[%s166 + $0x48] sm:$0xff]
      %v184 = vld [vmem:[%s166 + $0x50] sm:$0xff]
      %v185 = vld [vmem:[%s166 + $0x58] sm:$0xff]
      %v186 = vld [vmem:[%s166 + $0x60] sm:$0xff]
      %v187 = vld [vmem:[%s166 + $0x68] sm:$0xff]
      %v188 = vld [vmem:[%s166 + $0x70] sm:$0xff]
      %v189 = vld [vmem:[%s166 + $0x78] sm:$0xff]
      %v190 = vld [vmem:[%s166 + $0x80] sm:$0xff]
      %v191 = vld [vmem:[%s166 + $0x88] sm:$0xff]
      %v192 = vld [vmem:[%s166 + $0x90] sm:$0xff]
      %v193 = vld [vmem:[%s166 + $0x98] sm:$0xff]
      %v194 = vld [vmem:[%s166 + $0xa0] sm:$0xff]
      %v195 = vld [vmem:[%s1] sm:$0xff]
      %v196 = vld [vmem:[%s1 + $0x8] sm:$0xff]
      %v197 = vld [vmem:[%s1 + $0x10] sm:$0xff]
      %v198 = vld [vmem:[%s1 + $0x18] sm:$0xff]
      %v199 = vld [vmem:[%s2] sm:$0x1]
      %v201 = vlaneseq
      %v202 = vshrl.u32 %v201, 7
      %v203 = vsub.s32 0, %v202
      %v204 = vrot.slane %v199, %v203
      %vm206 = vcmask 261120
      %v208 = vsel %vm206, %v174, 0
      %v211 = vsel %vm206, %v175, 0
      %v214 = vsel %vm206, %v176, 0
      %v217 = vsel %vm206, %v177, 0
      %v220 = vsel %vm206, %v178, 0
      %v223 = vsel %vm206, %v179, 0
      %v226 = vsel %vm206, %v180, 0
      %v229 = vsel %vm206, %v181, 0
      %v232 = vsel %vm206, %v182, 0
      %v235 = vsel %vm206, %v183, 0
      %v238 = vsel %vm206, %v184, 0
      %v241 = vsel %vm206, %v185, 0
      %v244 = vsel %vm206, %v186, 0
      %v247 = vsel %vm206, %v187, 0
      %v250 = vsel %vm206, %v188, 0
      %v253 = vsel %vm206, %v189, 0
      %v256 = vsel %vm206, %v190, 0
      %v259 = vsel %vm206, %v191, 0
      %v262 = vsel %vm206, %v192, 0
      %v265 = vsel %vm206, %v193, 0
      %v268 = vsel %vm206, %v194, 0
      %270 = vmatprep.subr.mxu0 0.0
      %271 = vmatpush1.msra.mxu0 %v195
      %272 = vmatprep.subr.mxu0 0.0
      %273 = vmatpush1.msra.mxu0 %v196
      %274 = vmatprep.subr.mxu0 0.0
      %275 = vmatpush1.msra.mxu0 %v197
      %276 = vmatprep.subr.mxu0 0.0
      %277 = vmatpush1.msra.mxu0 %v198
      %278 = vmatprep.subr.mxu0 0.0
      %279 = vmatpush1.msra.mxu0 0.0
      %280 = vmatprep.subr.mxu0 0.0
      %281 = vmatpush1.msra.mxu0 0.0
      %282 = vmatprep.subr.mxu0 0.0
      %283 = vmatpush1.msra.mxu0 0.0
      %284 = vmatprep.subr.mxu0 0.0
      %285 = vmatpush1.msra.mxu0 0.0
      %286 = vmatprep.subr.mxu0 0.0
      %287 = vmatpush1.msra.mxu0 0.0
      %288 = vmatprep.subr.mxu0 0.0
      %289 = vmatpush1.msra.mxu0 0.0
      %290 = vmatprep.subr.mxu0 0.0
      %291 = vmatpush1.msra.mxu0 0.0
      %292 = vmatprep.subr.mxu0 0.0
      %293 = vmatpush1.msra.mxu0 0.0
      %294 = vmatprep.subr.mxu0 0.0
      %295 = vmatpush1.msra.mxu0 0.0
      %296 = vmatprep.subr.mxu0 0.0
      %297 = vmatpush1.msra.mxu0 0.0
      %298 = vmatprep.subr.mxu0 0.0
      %299 = vmatpush1.msra.mxu0 0.0
      %300 = vmatprep.subr.mxu0 0.0
      %301 = vmatpush1.msra.mxu0 0.0
      %302 = vmatprep.subr.mxu0 0.0
      %303 = vmatpush1.msra.mxu0 0.0
      %304 = vmatprep.subr.mxu0 0.0
      %305 = vmatpush1.msra.mxu0 0.0
      %306 = vmatprep.subr.mxu0 0.0
      %307 = vmatpush1.msra.mxu0 0.0
      %308 = vmatprep.subr.mxu0 0.0
      %309 = vmatpush1.msra.mxu0 0.0
      %310 = vmatprep.subr.mxu0 0.0
      %311 = vmatpush1.msra.mxu0 0.0
      %312 = vmatprep.subr.mxu0 0.0
      %313 = vmatpush1.msra.mxu0 0.0
      %314 = vmatprep.subr.mxu0 0.0
      %315 = vmatpush1.msra.mxu0 0.0
      %316 = vmatprep.subr.mxu0 0.0
      %317 = vmatpush1.msra.mxu0 0.0
      %318 = vmatprep.subr.mxu0 0.0
      %319 = vmatpush1.msra.mxu0 0.0
      %320 = vmatprep.subr.mxu0 0.0
      %321 = vmatpush1.msra.mxu0 0.0
      %322 = vmatprep.subr.mxu0 0.0
      %323 = vmatpush1.msra.mxu0 0.0
      %324 = vmatprep.subr.mxu0 0.0
      %325 = vmatpush1.msra.mxu0 0.0
      %326 = vmatprep.subr.mxu0 0.0
      %327 = vmatpush1.msra.mxu0 0.0
      %328 = vmatprep.subr.mxu0 0.0
      %329 = vmatpush1.msra.mxu0 0.0
      %330 = vmatprep.subr.mxu0 0.0
      %331 = vmatpush1.msra.mxu0 0.0
      %332 = vmatprep.subr.mxu0 0.0
      %333 = vmatpush1.msra.mxu0 0.0
      %334 = vmatprep.mubr.f32.mxu0 0.0
      %335 = vmatmul.mubr.f32.gmra.mrb[0].mxu0 %v208
      %v336 = vpop.f32.mrb[0].mxu0
      %v337 = vadd.f32 %v204, %v336
      %v338 = vpop.f32.mrb[0].mxu0
      %339 = vmatprep.mubr.f32.mxu0 0.0
      %340 = vmatmul.mubr.f32.gmra.mrb[0].mxu0 %v211
      %v341 = vpop.f32.mrb[0].mxu0
      %v342 = vadd.f32 %v204, %v341
      %v343 = vpop.f32.mrb[0].mxu0
      %344 = vmatprep.mubr.f32.mxu0 0.0
      %345 = vmatmul.mubr.f32.gmra.mrb[0].mxu0 %v214
      %v346 = vpop.f32.mrb[0].mxu0
      %v347 = vadd.f32 %v204, %v346
      %v348 = vpop.f32.mrb[0].mxu0
      %349 = vmatprep.mubr.f32.mxu0 0.0
      %350 = vmatmul.mubr.f32.gmra.mrb[0].mxu0 %v217
      %v351 = vpop.f32.mrb[0].mxu0
      %v352 = vadd.f32 %v204, %v351
      %v353 = vpop.f32.mrb[0].mxu0
      %354 = vmatprep.mubr.f32.mxu0 0.0
      %355 = vmatmul.mubr.f32.gmra.mrb[0].mxu0 %v220
      %v356 = vpop.f32.mrb[0].mxu0
      %v357 = vadd.f32 %v204, %v356
      %v358 = vpop.f32.mrb[0].mxu0
      %359 = vmatprep.mubr.f32.mxu0 0.0
      %360 = vmatmul.mubr.f32.gmra.mrb[0].mxu0 %v223
      %v361 = vpop.f32.mrb[0].mxu0
      %v362 = vadd.f32 %v204, %v361
      %v363 = vpop.f32.mrb[0].mxu0
      %364 = vmatprep.mubr.f32.mxu0 0.0
      %365 = vmatmul.mubr.f32.gmra.mrb[0].mxu0 %v226
      %v366 = vpop.f32.mrb[0].mxu0
      %v367 = vadd.f32 %v204, %v366
      %v368 = vpop.f32.mrb[0].mxu0
      %369 = vmatprep.mubr.f32.mxu0 0.0
      %370 = vmatmul.mubr.f32.gmra.mrb[0].mxu0 %v229
      %v371 = vpop.f32.mrb[0].mxu0
      %v372 = vadd.f32 %v204, %v371
      %v373 = vpop.f32.mrb[0].mxu0
      %374 = vmatprep.mubr.f32.mxu0 0.0
      %375 = vmatmul.mubr.f32.gmra.mrb[0].mxu0 %v232
      %v376 = vpop.f32.mrb[0].mxu0
      %v377 = vadd.f32 %v204, %v376
      %v378 = vpop.f32.mrb[0].mxu0
      %379 = vmatprep.mubr.f32.mxu0 0.0
      %380 = vmatmul.mubr.f32.gmra.mrb[0].mxu0 %v235
      %v381 = vpop.f32.mrb[0].mxu0
      %v382 = vadd.f32 %v204, %v381
      %v383 = vpop.f32.mrb[0].mxu0
      %384 = vmatprep.mubr.f32.mxu0 0.0
      %385 = vmatmul.mubr.f32.gmra.mrb[0].mxu0 %v238
      %v386 = vpop.f32.mrb[0].mxu0
      %v387 = vadd.f32 %v204, %v386
      %v388 = vpop.f32.mrb[0].mxu0
      %389 = vmatprep.mubr.f32.mxu0 0.0
      %390 = vmatmul.mubr.f32.gmra.mrb[0].mxu0 %v241
      %v391 = vpop.f32.mrb[0].mxu0
      %v392 = vadd.f32 %v204, %v391
      %v393 = vpop.f32.mrb[0].mxu0
      %394 = vmatprep.mubr.f32.mxu0 0.0
      %395 = vmatmul.mubr.f32.gmra.mrb[0].mxu0 %v244
      %v396 = vpop.f32.mrb[0].mxu0
      %v397 = vadd.f32 %v204, %v396
      %v398 = vpop.f32.mrb[0].mxu0
      %399 = vmatprep.mubr.f32.mxu0 0.0
      %400 = vmatmul.mubr.f32.gmra.mrb[0].mxu0 %v247
      %v401 = vpop.f32.mrb[0].mxu0
      %v402 = vadd.f32 %v204, %v401
      %v403 = vpop.f32.mrb[0].mxu0
      %404 = vmatprep.mubr.f32.mxu0 0.0
      %405 = vmatmul.mubr.f32.gmra.mrb[0].mxu0 %v250
      %v406 = vpop.f32.mrb[0].mxu0
      %v407 = vadd.f32 %v204, %v406
      %v408 = vpop.f32.mrb[0].mxu0
      %409 = vmatprep.mubr.f32.mxu0 0.0
      %410 = vmatmul.mubr.f32.gmra.mrb[0].mxu0 %v253
      %v411 = vpop.f32.mrb[0].mxu0
      %v412 = vadd.f32 %v204, %v411
      %v413 = vpop.f32.mrb[0].mxu0
      %414 = vmatprep.mubr.f32.mxu0 0.0
      %415 = vmatmul.mubr.f32.gmra.mrb[0].mxu0 %v256
      %v416 = vpop.f32.mrb[0].mxu0
      %v417 = vadd.f32 %v204, %v416
      %v418 = vpop.f32.mrb[0].mxu0
      %419 = vmatprep.mubr.f32.mxu0 0.0
      %420 = vmatmul.mubr.f32.gmra.mrb[0].mxu0 %v259
      %v421 = vpop.f32.mrb[0].mxu0
      %v422 = vadd.f32 %v204, %v421
      %v423 = vpop.f32.mrb[0].mxu0
      %424 = vmatprep.mubr.f32.mxu0 0.0
      %425 = vmatmul.mubr.f32.gmra.mrb[0].mxu0 %v262
      %v426 = vpop.f32.mrb[0].mxu0
      %v427 = vadd.f32 %v204, %v426
      %v428 = vpop.f32.mrb[0].mxu0
      %429 = vmatprep.mubr.f32.mxu0 0.0
      %430 = vmatmul.mubr.f32.gmra.mrb[0].mxu0 %v265
      %v431 = vpop.f32.mrb[0].mxu0
      %v432 = vadd.f32 %v204, %v431
      %v433 = vpop.f32.mrb[0].mxu0
      %434 = vmatprep.mubr.f32.mxu0 0.0
      %435 = vmatmul.mubr.f32.gmra.mrb[0].mxu0 %v268
      %v436 = vpop.f32.mrb[0].mxu0
      %v437 = vadd.f32 %v204, %v436
      %v438 = vpop.f32.mrb[0].mxu0
      %439 = vdwg.mxu0
      %vm440 = vcmask 392192
      %441 = vst.msk [vmem:[%s172] sm:$0xff] %vm440, %v337
      %442 = vst.msk [vmem:[%s172 + $0x8] sm:$0xff] %vm440, %v342
      %443 = vst.msk [vmem:[%s172 + $0x10] sm:$0xff] %vm440, %v347
      %444 = vst.msk [vmem:[%s172 + $0x18] sm:$0xff] %vm440, %v352
      %445 = vst.msk [vmem:[%s172 + $0x20] sm:$0xff] %vm440, %v357
      %446 = vst.msk [vmem:[%s172 + $0x28] sm:$0xff] %vm440, %v362
      %447 = vst.msk [vmem:[%s172 + $0x30] sm:$0xff] %vm440, %v367
      %448 = vst.msk [vmem:[%s172 + $0x38] sm:$0xff] %vm440, %v372
      %449 = vst.msk [vmem:[%s172 + $0x40] sm:$0xff] %vm440, %v377
      %450 = vst.msk [vmem:[%s172 + $0x48] sm:$0xff] %vm440, %v382
      %451 = vst.msk [vmem:[%s172 + $0x50] sm:$0xff] %vm440, %v387
      %452 = vst.msk [vmem:[%s172 + $0x58] sm:$0xff] %vm440, %v392
      %453 = vst.msk [vmem:[%s172 + $0x60] sm:$0xff] %vm440, %v397
      %454 = vst.msk [vmem:[%s172 + $0x68] sm:$0xff] %vm440, %v402
      %455 = vst.msk [vmem:[%s172 + $0x70] sm:$0xff] %vm440, %v407
      %456 = vst.msk [vmem:[%s172 + $0x78] sm:$0xff] %vm440, %v412
      %457 = vst.msk [vmem:[%s172 + $0x80] sm:$0xff] %vm440, %v417
      %458 = vst.msk [vmem:[%s172 + $0x88] sm:$0xff] %vm440, %v422
      %459 = vst.msk [vmem:[%s172 + $0x90] sm:$0xff] %vm440, %v427
      %460 = vst.msk [vmem:[%s172 + $0x98] sm:$0xff] %vm440, %v432
      %461 = vst.msk [vmem:[%s172 + $0xa0] sm:$0xff] %vm440, %v437
      %s462 = smul.u32 21, %s14
      %p463 = scmp.lt.s32.totalorder %s462, 41
      %s464 = scalar_select %p463, %s462, 41
      %s465 = smul.addr %s464, 8
      %s466 = scalar_lea.vmem %s3, %s465
      // Predicated region
      $region33: #{tpu_custom_call.1} parent=31 // pred_check
        %p467 = pneg %p100
      $region34: #{tpu_custom_call.1} parent=31 // pred_check_branch
        %469 = sbr.rel (%p467) target = $region36
      $region35: #{tpu_custom_call.1} parent=31 // pred_region
        %s470 = smul.u32 21, %s14
      $region36: #{tpu_custom_call.1} parent=31 // pred_fallthru
        _
    $region32: #{tpu_custom_call.1} parent=5 // pred_fallthru
      _
    %p471 = scmp.le.s32.totalorder 2, %s9
    // Predicated region
    $region37: #{tpu_custom_call.1} parent=5 // pred_check
      %p472 = pneg %p471
    $region38: #{tpu_custom_call.1} parent=5 // pred_check_branch
      %474 = sbr.rel (%p472) target = $region40
    $region39: #{tpu_custom_call.1} parent=5 // pred_region
      %s475 = ssub.s32 %s9, 2
      // Predicated region
      $region41: #{tpu_custom_call.1} parent=39 // pred_check
        %p476 = pneg %p106
      $region42: #{tpu_custom_call.1} parent=39 // pred_check_branch
        %478 = sbr.rel (%p476) target = $region44
      $region43: #{tpu_custom_call.1} parent=39 // pred_region
        %s479 = smul.u32 21, %s15
        %p480 = scmp.lt.s32.totalorder %s479, 41
        %s481 = scalar_select %p480, %s479, 41
        %s482 = smul.addr %s481, 8
        %s483 = scalar_lea.vmem %s3, %s482
      $region44: #{tpu_custom_call.1} parent=39 // pred_fallthru
        _
    $region40: #{tpu_custom_call.1} parent=5 // pred_fallthru
      _
  $region6: #{tpu_custom_call.1} parent=0 // loop_footer
    %s13 = sadd.s32 1, %s9
  $region7: #{tpu_custom_call.1} parent=0 // loop_footer_branch
    %8 = sbr.rel target = $region3
  $region8: #{tpu_custom_call.1} parent=0 // loop_exit
    _

</llo_original>
